<compile_context>
chip_gen: v7x
topology: tpu7x:2x2x1
jax: 0.10.0
libtpu: 0.0.40
codegen_flags: <defaults>
</compile_context>

<pallas_src>
import functools

import jax
import jax.numpy as jnp
from jax.experimental import pallas as pl
from jax.experimental.pallas import tpu as pltpu

_LANE = 128
_SUB = 8


def _round_up(x, m):
    return ((x + m - 1) // m) * m


def _pow(base, exponent):
    # Shared by kernel and reference so the formulas match bit-for-bit-ish;
    # integer gamma avoids exp/log-based pow.
    if float(exponent).is_integer():
        return jax.lax.integer_pow(base, int(exponent))
    return base ** exponent


def _focal_sums_kernel(alpha_ref, x_ref, m_ref, acc_ref, *, gamma):
    """Accumulates lane-dense per-batch partial focal-loss sums for one tile."""
    t = pl.program_id(1)

    @pl.when(t == 0)
    def _():
        acc_ref[...] = jnp.zeros_like(acc_ref)

    x = x_ref[...].astype(jnp.float32)           # (1, C, S, 128) logits (f32 math)
    m = m_ref[...][:, None, :, :]                # (1, 1, S, 128) int32 target ids
    C = x.shape[1]

    # log-softmax over the channel axis. C is a tiny leading dim, so these
    # reductions are (C-1) elementwise ops over (S, 128) slabs (pure VPU/EUP).
    xmax = jnp.max(x, axis=1, keepdims=True)
    shifted = x - xmax
    denom = jnp.sum(jnp.exp(shifted), axis=1, keepdims=True)      # (1, 1, S, 128)
    log_denom = jnp.log(denom)[:, 0]                              # (1, S, 128)

    # one-hot(target) along the channel axis; padded pixels carry id -1 so
    # their one-hot row is all-zero and they contribute exactly 0 below.
    c_iota = jax.lax.broadcasted_iota(jnp.int32, x.shape, 1)
    onehot = (c_iota == m).astype(jnp.float32)                    # (1, C, S, 128)

    # gather target log-prob:  logp_t = shifted[target] - log_denom
    s_t = jnp.sum(onehot * shifted, axis=1)                       # (1, S, 128)
    logp_t = s_t - log_denom
    p_t = jnp.exp(logp_t)                                         # target prob

    # alpha[target] per pixel (== valid-pixel mask when alpha is all-ones),
    # built from SMEM scalars with splat multiplies (C is static & small).
    a_t = onehot[:, 0] * alpha_ref[0]
    for c in range(1, C):
        a_t = a_t + onehot[:, c] * alpha_ref[c]

    focal_w = _pow(1.0 - p_t, gamma)
    loss = -(a_t * focal_w) * logp_t                              # (1, S, 128)

    # Collapse the S sublane-rows to 8 with elementwise adds (no XLU) and
    # accumulate into the lane-dense resident accumulator.
    S = loss.shape[1]
    part = loss.reshape(1, S // _SUB, _SUB, _LANE).sum(axis=1)    # (1, 8, 128)
    acc_ref[...] += part


def focal_loss(logits, targets, gamma=2.0, alpha=None, reduction="mean",
               block_pixels=32 * 1024, vmem_budget_bytes=8 * 1024 * 1024):
    """logits: (B, C, H, W) float; targets: (B, H, W) integer class ids."""
    B, C, H, W = logits.shape
    HW = H * W

    # Spatial layout: HW pixels -> R rows x 128 lanes; each grid step eats S
    # rows (multiple of 8). Pick the largest S within the VMEM budget.
    R = pl.cdiv(HW, _LANE)
    S = max(_SUB, min(block_pixels // _LANE, _round_up(R, _SUB)))
    S = _round_up(S, _SUB)

    def _tile_bytes(s):
        # double-buffered logits + mask blocks (accumulator/alpha are tiny)
        return 2 * (C * s * _LANE * logits.dtype.itemsize) + 2 * (s * _LANE * 4)

    while S > _SUB and _tile_bytes(S) > vmem_budget_bytes:
        S -= _SUB

    R_pad = _round_up(R, S)
    HW_pad = R_pad * _LANE
    n_t = R_pad // S

    # Keep the caller's dtype for logits (bf16 halves HBM traffic); masks int32.
    x = logits.reshape(B, C, HW)
    m = targets.reshape(B, HW).astype(jnp.int32)
    if HW_pad != HW:
        x = jnp.pad(x, ((0, 0), (0, 0), (0, HW_pad - HW)))
        m = jnp.pad(m, ((0, 0), (0, HW_pad - HW)), constant_values=-1)
    x = x.reshape(B, C, R_pad, _LANE)
    m = m.reshape(B, R_pad, _LANE)

    # Per-class alpha (None / scalar / vector -> length-C vector). Also serves
    # as the valid-pixel mask for the padded region.
    if alpha is None:
        a = jnp.ones((C,), jnp.float32)
    else:
        a = jnp.broadcast_to(jnp.asarray(alpha, jnp.float32).reshape(-1), (C,))

    acc = pl.pallas_call(
        functools.partial(_focal_sums_kernel, gamma=float(gamma)),
        out_shape=jax.ShapeDtypeStruct((B, _SUB, _LANE), jnp.float32),
        grid_spec=pltpu.PrefetchScalarGridSpec(
            num_scalar_prefetch=1,                       # alpha -> SMEM
            grid=(B, n_t),
            in_specs=[
                pl.BlockSpec((1, C, S, _LANE), lambda b, t, _: (b, 0, t, 0)),
                pl.BlockSpec((1, S, _LANE), lambda b, t, _: (b, t, 0)),
            ],
            out_specs=pl.BlockSpec((1, _SUB, _LANE), lambda b, t, _: (b, 0, 0)),
        ),
        compiler_params=pltpu.CompilerParams(
            dimension_semantics=("parallel", "arbitrary")),
    )(a, x, m)

    total = jnp.sum(acc)        # tiny (B, 8, 128) reduction in JAX glue
    if reduction == "mean":
        return total / (B * HW)
    if reduction == "sum":
        return total
    # TODO(synk): reduction='none' (per-pixel (B,1,H,W) loss map) is not wired
    # through the Pallas path; only 'mean' and 'sum' are supported here.
    raise NotImplementedError("reduction must be 'mean' or 'sum'")


def _reference_focal_loss(logits, targets, gamma=2.0, alpha=None,
                          reduction="mean"):
    """Pure-JAX reference mirroring the PyTorch FocalLoss.forward."""
    logp = jax.nn.log_softmax(logits.astype(jnp.float32), axis=1)
    probs = jnp.exp(logp)
    t = targets.astype(jnp.int32)[:, None]                 # (B, 1, H, W)
    logp_t = jnp.take_along_axis(logp, t, axis=1)
    p_t = jnp.take_along_axis(probs, t, axis=1)
    focal_w = _pow(1.0 - p_t, gamma)
    if alpha is not None:
        a = jnp.asarray(alpha, jnp.float32)
        if a.ndim > 0:
            focal_w = focal_w * a[targets.astype(jnp.int32)][:, None]
        else:
            focal_w = focal_w * a
    loss = -focal_w * logp_t
    if reduction == "mean":
        return loss.mean()
    if reduction == "sum":
        return loss.sum()
    return loss


if __name__ == "__main__":
    key = jax.random.PRNGKey(0)
    k1, k2 = jax.random.split(key)

    B, C, H, W = 2, 4, 16, 16   # small stand-in for (B, C, 512, 512)
    logits = jax.random.normal(k1, (B, C, H, W), dtype=jnp.float32)
    targets = jax.random.randint(k2, (B, H, W), 0, C, dtype=jnp.int32)

    # default config: gamma=2.0, alpha=None, reduction='mean'
    loss = jax.block_until_ready(focal_loss(logits, targets))
    ref = jax.block_until_ready(_reference_focal_loss(logits, targets))
    assert jnp.allclose(loss, ref, atol=1e-5, rtol=1e-5), (loss, ref)

    # alpha (per-class) + 'sum' reduction path
    alpha = jnp.array([0.25, 0.5, 0.75, 1.0], dtype=jnp.float32)
    loss2 = jax.block_until_ready(
        focal_loss(logits, targets, gamma=2.0, alpha=alpha, reduction="sum"))
    ref2 = jax.block_until_ready(
        _reference_focal_loss(logits, targets, gamma=2.0, alpha=alpha,
                              reduction="sum"))
    assert jnp.allclose(loss2, ref2, atol=1e-4, rtol=1e-5), (loss2, ref2)

    print("KERNEL_OK")
</pallas_src>

<mosaic_0001>
module attributes {stable_mosaic.version = 11 : i64} {
  func.func @_focal_sums_kernel(%arg0: i32, %arg1: i32, %arg2: memref<4xf32, #tpu.memory_space<smem>>, %arg3: memref<1x4x8x128xf32, #tpu.memory_space<vmem>>, %arg4: memref<1x8x128xi32, #tpu.memory_space<vmem>>, %arg5: memref<1x8x128xf32, #tpu.memory_space<vmem>>) attributes {dimension_semantics = [#tpu.dimension_semantics<parallel>, #tpu.dimension_semantics<arbitrary>], iteration_bounds = array<i64: 2, 1>, scalar_prefetch = 1 : i64, scratch_operands = 0 : i64, tpu.core_type = #tpu.core_type<tc>, window_params = [{transform_indices = @transform_0, window_bounds = array<i64: 1, 4, 8, 128>}, {transform_indices = @transform_1, window_bounds = array<i64: 1, 8, 128>}, {transform_indices = @transform_2, window_bounds = array<i64: 1, 8, 128>}]} {
    %c0_i32 = arith.constant 0 : i32
    %0 = arith.cmpi eq, %arg1, %c0_i32 : i32
    %1 = arith.extui %0 : i1 to i32
    %c0_i32_0 = arith.constant 0 : i32
    %2 = arith.cmpi ne, %1, %c0_i32_0 : i32
    scf.if %2 {
      %cst_19 = arith.constant 0.000000e+00 : f32
      %59 = vector.broadcast %cst_19 : f32 to vector<1x8x128xf32>
      %c0_20 = arith.constant 0 : index
      %c0_21 = arith.constant 0 : index
      %c0_22 = arith.constant 0 : index
      %60 = vector.load %arg5[%c0_20, %c0_21, %c0_22] : memref<1x8x128xf32, #tpu.memory_space<vmem>>, vector<1x8x128xf32>
      tpu.vector_store %arg5[%c0_20, %c0_21, %c0_22], %59 {strides = array<i32>} : memref<1x8x128xf32, #tpu.memory_space<vmem>>, vector<1x8x128xf32>,
    } else {
    }
    %c0 = arith.constant 0 : index
    %c0_1 = arith.constant 0 : index
    %c0_2 = arith.constant 0 : index
    %c0_3 = arith.constant 0 : index
    %3 = vector.load %arg3[%c0, %c0_1, %c0_2, %c0_3] : memref<1x4x8x128xf32, #tpu.memory_space<vmem>>, vector<1x4x8x128xf32>
    %c0_4 = arith.constant 0 : index
    %c0_5 = arith.constant 0 : index
    %c0_6 = arith.constant 0 : index
    %4 = vector.load %arg4[%c0_4, %c0_5, %c0_6] : memref<1x8x128xi32, #tpu.memory_space<vmem>>, vector<1x8x128xi32>
    %5 = vector.shape_cast %4 : vector<1x8x128xi32> to vector<1x1x8x128xi32>
    %cst = arith.constant dense<0xFF800000> : vector<1x8x128xf32>
    %6 = vector.multi_reduction <maximumf>, %3, %cst [1] : vector<1x4x8x128xf32> to vector<1x8x128xf32>
    %7 = vector.shape_cast %6 : vector<1x8x128xf32> to vector<1x1x8x128xf32>
    %8 = vector.broadcast %7 : vector<1x1x8x128xf32> to vector<1x4x8x128xf32>
    %9 = arith.subf %3, %8 : vector<1x4x8x128xf32>
    %10 = math.exp %9 : vector<1x4x8x128xf32>
    %cst_7 = arith.constant dense<0.000000e+00> : vector<1x8x128xf32>
    %11 = vector.multi_reduction <add>, %10, %cst_7 [1] : vector<1x4x8x128xf32> to vector<1x8x128xf32>
    %12 = vector.shape_cast %11 : vector<1x8x128xf32> to vector<1x1x8x128xf32>
    %13 = math.log %12 : vector<1x1x8x128xf32>
    %14 = vector.shape_cast %13 : vector<1x1x8x128xf32> to vector<1x8x128xf32>
    %15 = tpu.iota {dimensions = array<i32: 1>} : vector<1x4x8x128xi32>
    %16 = vector.broadcast %5 : vector<1x1x8x128xi32> to vector<1x4x8x128xi32>
    %17 = arith.cmpi eq, %15, %16 : vector<1x4x8x128xi32>
    %18 = arith.extui %17 : vector<1x4x8x128xi1> to vector<1x4x8x128xi32>
    %19 = arith.sitofp %18 : vector<1x4x8x128xi32> to vector<1x4x8x128xf32>
    %20 = arith.mulf %19, %9 : vector<1x4x8x128xf32>
    %cst_8 = arith.constant dense<0.000000e+00> : vector<1x8x128xf32>
    %21 = vector.multi_reduction <add>, %20, %cst_8 [1] : vector<1x4x8x128xf32> to vector<1x8x128xf32>
    %22 = arith.subf %21, %14 : vector<1x8x128xf32>
    %23 = math.exp %22 : vector<1x8x128xf32>
    %24 = vector.extract_strided_slice %19 {offsets = [0, 0, 0, 0], sizes = [1, 1, 8, 128], strides = [1, 1, 1, 1]} : vector<1x4x8x128xf32> to vector<1x1x8x128xf32>
    %25 = vector.shape_cast %24 : vector<1x1x8x128xf32> to vector<1x8x128xf32>
    %c0_9 = arith.constant 0 : index
    %26 = memref.load %arg2[%c0_9] : memref<4xf32, #tpu.memory_space<smem>>
    %27 = vector.broadcast %26 : f32 to vector<1x8x128xf32>
    %28 = arith.mulf %25, %27 : vector<1x8x128xf32>
    %29 = vector.extract_strided_slice %19 {offsets = [0, 1, 0, 0], sizes = [1, 1, 8, 128], strides = [1, 1, 1, 1]} : vector<1x4x8x128xf32> to vector<1x1x8x128xf32>
    %30 = vector.shape_cast %29 : vector<1x1x8x128xf32> to vector<1x8x128xf32>
    %c1 = arith.constant 1 : index
    %31 = memref.load %arg2[%c1] : memref<4xf32, #tpu.memory_space<smem>>
    %32 = vector.broadcast %31 : f32 to vector<1x8x128xf32>
    %33 = arith.mulf %30, %32 : vector<1x8x128xf32>
    %34 = arith.addf %28, %33 : vector<1x8x128xf32>
    %35 = vector.extract_strided_slice %19 {offsets = [0, 2, 0, 0], sizes = [1, 1, 8, 128], strides = [1, 1, 1, 1]} : vector<1x4x8x128xf32> to vector<1x1x8x128xf32>
    %36 = vector.shape_cast %35 : vector<1x1x8x128xf32> to vector<1x8x128xf32>
    %c2 = arith.constant 2 : index
    %37 = memref.load %arg2[%c2] : memref<4xf32, #tpu.memory_space<smem>>
    %38 = vector.broadcast %37 : f32 to vector<1x8x128xf32>
    %39 = arith.mulf %36, %38 : vector<1x8x128xf32>
    %40 = arith.addf %34, %39 : vector<1x8x128xf32>
    %41 = vector.extract_strided_slice %19 {offsets = [0, 3, 0, 0], sizes = [1, 1, 8, 128], strides = [1, 1, 1, 1]} : vector<1x4x8x128xf32> to vector<1x1x8x128xf32>
    %42 = vector.shape_cast %41 : vector<1x1x8x128xf32> to vector<1x8x128xf32>
    %c3 = arith.constant 3 : index
    %43 = memref.load %arg2[%c3] : memref<4xf32, #tpu.memory_space<smem>>
    %44 = vector.broadcast %43 : f32 to vector<1x8x128xf32>
    %45 = arith.mulf %42, %44 : vector<1x8x128xf32>
    %46 = arith.addf %40, %45 : vector<1x8x128xf32>
    %cst_10 = arith.constant 1.000000e+00 : f32
    %47 = vector.broadcast %cst_10 : f32 to vector<1x8x128xf32>
    %48 = arith.subf %47, %23 : vector<1x8x128xf32>
    %49 = arith.mulf %48, %48 : vector<1x8x128xf32>
    %50 = arith.mulf %46, %49 : vector<1x8x128xf32>
    %cst_11 = arith.constant 0.000000e+00 : f32
    %51 = vector.broadcast %cst_11 : f32 to vector<1x8x128xf32>
    %52 = arith.subf %51, %50 : vector<1x8x128xf32>
    %53 = arith.mulf %52, %22 : vector<1x8x128xf32>
    %54 = vector.shape_cast %53 : vector<1x8x128xf32> to vector<1x1x8x128xf32>
    %cst_12 = arith.constant dense<0.000000e+00> : vector<1x8x128xf32>
    %55 = vector.multi_reduction <add>, %54, %cst_12 [1] : vector<1x1x8x128xf32> to vector<1x8x128xf32>
    %c0_13 = arith.constant 0 : index
    %c0_14 = arith.constant 0 : index
    %c0_15 = arith.constant 0 : index
    %56 = vector.load %arg5[%c0_13, %c0_14, %c0_15] : memref<1x8x128xf32, #tpu.memory_space<vmem>>, vector<1x8x128xf32>
    %57 = arith.addf %56, %55 : vector<1x8x128xf32>
    %c0_16 = arith.constant 0 : index
    %c0_17 = arith.constant 0 : index
    %c0_18 = arith.constant 0 : index
    %58 = vector.load %arg5[%c0_16, %c0_17, %c0_18] : memref<1x8x128xf32, #tpu.memory_space<vmem>>, vector<1x8x128xf32>
    tpu.vector_store %arg5[%c0_16, %c0_17, %c0_18], %57 {strides = array<i32>} : memref<1x8x128xf32, #tpu.memory_space<vmem>>, vector<1x8x128xf32>,
    return
  }
  func.func @transform_0(%arg0: i32, %arg1: i32, %arg2: memref<4xf32, #tpu.memory_space<smem>>) -> (i32, i32, i32, i32) {
    %c0_i32 = arith.constant 0 : i32
    %c0_i32_0 = arith.constant 0 : i32
    %c0_i32_1 = arith.constant 0 : i32
    return %arg0, %c0_i32, %arg1, %c0_i32_0 : i32, i32, i32, i32
  }
  func.func @transform_1(%arg0: i32, %arg1: i32, %arg2: memref<4xf32, #tpu.memory_space<smem>>) -> (i32, i32, i32) {
    %c0_i32 = arith.constant 0 : i32
    %c0_i32_0 = arith.constant 0 : i32
    return %arg0, %arg1, %c0_i32 : i32, i32, i32
  }
  func.func @transform_2(%arg0: i32, %arg1: i32, %arg2: memref<4xf32, #tpu.memory_space<smem>>) -> (i32, i32, i32) {
    %c0_i32 = arith.constant 0 : i32
    %c0_i32_0 = arith.constant 0 : i32
    %c0_i32_1 = arith.constant 0 : i32
    return %arg0, %c0_i32, %c0_i32_0 : i32, i32, i32
  }
}

</mosaic_0001>

<llo_original>
// kernel: tpu_custom_call.1
$region0: #{tpu_custom_call.1}
  #allocation0 [shape = 'u32[]', space=smem, size = 0x4, offset = 0x4, fixed_abs, tag = 'smem constant byte address 0x4 - core index']
  #allocation1 [shape = 'u32[144,128]{1,0:T(1,128)}', space=vmem, size = 0x12000, scoped, tag = 'internal scratch']
  #allocation2 [shape = 's32[1]{0}', space=sflag, size = 0x4, scoped, tag = 'scoped memory for tpu_custom_call.1']
  #allocation3 [shape = 'u8[512]{0}', space=smem, size = 0x200, scoped, tag = 'prefetched SMEM operand 0']
  %s0 = inlined_call_operand.hbm [shape: f32[4], index: 0, kind: input, shape index: {}]
  %s1 = inlined_call_operand.hbm [shape: f32[2,4,8,128], index: 1, kind: input, shape index: {}]
  %s2 = inlined_call_operand.hbm [shape: s32[2,8,128], index: 2, kind: input, shape index: {}]
  %s3 = inlined_call_operand.hbm [shape: f32[2,8,128], index: 3, kind: output, shape index: {}]
  %s4 = sld [smem:[#allocation0]]
  $region53: #{tpu_custom_call.1} parent=0
    _
  %s6 = ssub.s32 1, %s4
  %s7 = scalar_select 0, %s6, %s4
  %9 = dma.hbm_to_smem %s0, 16, [#allocation3], [#allocation2]
  %10 = dma.done [#allocation2], 16
  %11 = sfence
  $region1: #{tpu_custom_call.1} parent=0
    #allocation4 [shape = 'u8[32768]{0}', space=vmem, size = 0x8000, scoped, tag = 'input window, operand 1']
    #allocation5 [shape = 's32[2]{0}', space=sflag, size = 0x8, scoped, tag = 'scoped memory for tpu_custom_call.1']
    #allocation6 [shape = 's32[2]{0}', space=sflag, size = 0x8, scoped, tag = 'scoped memory for tpu_custom_call.1']
    #allocation7 [shape = 'u8[8192]{0}', space=vmem, size = 0x2000, scoped, tag = 'input window, operand 2']
    #allocation8 [shape = 's32[2]{0}', space=sflag, size = 0x8, scoped, tag = 'scoped memory for tpu_custom_call.1']
    #allocation9 [shape = 'u8[8192]{0}', space=vmem, size = 0x2000, scoped, tag = 'output window, operand 0']
    %12 = vsyncpa [#allocation5], 0
    %s13 = scalar_lea.sflag [#allocation5], 1
    %14 = vsyncpa %s13, 0
    %15 = vsyncpa [#allocation8], 0
    %s16 = scalar_lea.sflag [#allocation8], 1
    %17 = vsyncpa %s16, 0
    %18 = vsyncpa [#allocation6], 0
    %s19 = scalar_lea.sflag [#allocation6], 1
    %20 = vsyncpa %s19, 0
    loop: start=0, step=1, limit=4
    $region2: #{tpu_custom_call.1} parent=1 // loop_pre_header
      _
    $region3: #{tpu_custom_call.1} parent=1 // loop_header
      %s22 = sphi 0, %s26
      %p23 = scmp.ge.s32.totalorder %s22, 4
      %s29 = sphi 0, %s41
      %s30 = sphi 0, %s37
      %s31 = sphi 0, %s29
      %s32 = sphi 0, %s30
      %s33 = sphi 0, %s31
      %s34 = sphi 0, %s32
      %s46 = sphi 0, %s48
      %s49 = sphi 0, %s46
      %s50 = sphi 0, %s49
      %s66 = sphi 0, %s50
      %s74 = sphi 0, %s76
      %s77 = sphi 0, %s74
      %s78 = sphi 0, %s77
      %s94 = sphi 0, %s78
      %s100 = sphi 0, %s102
      %s103 = sphi 0, %s100
      %s104 = sphi 0, %s103
      %s120 = sphi 0, %s104
    $region4: #{tpu_custom_call.1} parent=1 // loop_header_branch
      %25 = sbr.rel (%p23) target = $region8
    $region5: #{tpu_custom_call.1} parent=1 // loop_body
      %s27 = ssub.s32 %s22, 1
      %s28 = ssub.s32 %s22, 2
      %s35 = sadd.s32 1, %s30
      %p36 = scmp.ge.s32.totalorder %s35, 1
      %s37 = scalar_select %p36, 0, %s35
      %s38 = sadd.s32 1, %s29
      %s39 = scalar_select %p36, %s38, %s29
      %p40 = scmp.ge.s32.totalorder %s39, 2
      %s41 = scalar_select %p40, 0, %s39
      %s42 = ssub.s32 %s29, %s41
      %s43 = ssub.s32 %s30, %s37
      %s44 = sor.u32 %s42, %s43
      %p45 = scmp.eq.s32.totalorder %s44, 0
      %s47 = sadd.s32 %s46, 1
      %s48 = scalar_select %p45, %s46, %s47
      %p51 = pneg %p45
      %p52 = scmp.eq.s32.totalorder %s22, 1
      %p53 = por %p51, %p52
      %p54 = scmp.ne.s32.totalorder %s46, %s49
      %p55 = scmp.eq.s32.totalorder %s22, 0
      %p56 = por %p54, %p55
      %p57 = scmp.ne.s32.totalorder %s46, %s49
      %p58 = scmp.eq.s32.totalorder %s27, 1
      %p59 = por %p57, %p58
      %p60 = scmp.ne.s32.totalorder %s49, %s50
      %p61 = scmp.eq.s32.totalorder %s27, 0
      %p62 = por %p60, %p61
      %p63 = scmp.ne.s32.totalorder %s49, %s50
      %p64 = scmp.eq.s32.totalorder %s28, 1
      %p65 = por %p63, %p64
      %p67 = scmp.ne.s32.totalorder %s50, %s66
      %p68 = scmp.eq.s32.totalorder %s28, 0
      %p69 = por %p67, %p68
      %s70 = ssub.s32 %s29, %s41
      %s71 = ssub.s32 %s30, %s37
      %s72 = sor.u32 %s70, %s71
      %p73 = scmp.eq.s32.totalorder %s72, 0
      %s75 = sadd.s32 %s74, 1
      %s76 = scalar_select %p73, %s74, %s75
      %p79 = pneg %p73
      %p80 = scmp.eq.s32.totalorder %s22, 1
      %p81 = por %p79, %p80
      %p82 = scmp.ne.s32.totalorder %s74, %s77
      %p83 = scmp.eq.s32.totalorder %s22, 0
      %p84 = por %p82, %p83
      %p85 = scmp.ne.s32.totalorder %s74, %s77
      %p86 = scmp.eq.s32.totalorder %s27, 1
      %p87 = por %p85, %p86
      %p88 = scmp.ne.s32.totalorder %s77, %s78
      %p89 = scmp.eq.s32.totalorder %s27, 0
      %p90 = por %p88, %p89
      %p91 = scmp.ne.s32.totalorder %s77, %s78
      %p92 = scmp.eq.s32.totalorder %s28, 1
      %p93 = por %p91, %p92
      %p95 = scmp.ne.s32.totalorder %s78, %s94
      %p96 = scmp.eq.s32.totalorder %s28, 0
      %p97 = por %p95, %p96
      %s98 = ssub.s32 %s29, %s41
      %p99 = scmp.eq.s32.totalorder %s98, 0
      %s101 = sadd.s32 %s100, 1
      %s102 = scalar_select %p99, %s100, %s101
      %p105 = pneg %p99
      %p106 = scmp.eq.s32.totalorder %s22, 1
      %p107 = por %p105, %p106
      %p108 = scmp.ne.s32.totalorder %s100, %s103
      %p109 = scmp.eq.s32.totalorder %s22, 0
      %p110 = por %p108, %p109
      %p111 = scmp.ne.s32.totalorder %s100, %s103
      %p112 = scmp.eq.s32.totalorder %s27, 1
      %p113 = por %p111, %p112
      %p114 = scmp.ne.s32.totalorder %s103, %s104
      %p115 = scmp.eq.s32.totalorder %s27, 0
      %p116 = por %p114, %p115
      %p117 = scmp.ne.s32.totalorder %s103, %s104
      %p118 = scmp.eq.s32.totalorder %s28, 1
      %p119 = por %p117, %p118
      %p121 = scmp.ne.s32.totalorder %s104, %s120
      %p122 = scmp.eq.s32.totalorder %s28, 0
      %p123 = por %p121, %p122
      %p124 = scmp.le.s32.totalorder 1, %s22
      %p125 = scmp.lt.s32.totalorder %s22, 3
      %p126 = pnand %p124, %p125
      %p127 = pneg %p126
      // Predicated region
      $region9: #{tpu_custom_call.1} parent=5 // pred_check
        _
      $region10: #{tpu_custom_call.1} parent=5 // pred_check_branch
        %129 = sbr.rel (%p126) target = $region12
      $region11: #{tpu_custom_call.1} parent=5 // pred_region
        %s130 = ssub.s32 %s22, 1
      $region12: #{tpu_custom_call.1} parent=5 // pred_fallthru
        _
      %p131 = scmp.lt.s32.totalorder %s22, 2
      // Predicated region
      $region13: #{tpu_custom_call.1} parent=5 // pred_check
        %p132 = pneg %p131
      $region14: #{tpu_custom_call.1} parent=5 // pred_check_branch
        %134 = sbr.rel (%p132) target = $region16
      $region15: #{tpu_custom_call.1} parent=5 // pred_region
        // Predicated region
        $region17: #{tpu_custom_call.1} parent=15 // pred_check
          %p135 = pneg %p56
        $region18: #{tpu_custom_call.1} parent=15 // pred_check_branch
          %137 = sbr.rel (%p135) target = $region20
        $region19: #{tpu_custom_call.1} parent=15 // pred_region
          %s138 = sand.u32 %s46, 1
          %s139 = scalar_lea.sflag [#allocation5], %s138
          %s140 = sand.u32 %s46, 1
          %s141 = smul.addr %s140, 32
          %s142 = scalar_lea.vmem [#allocation4], %s141
          %s144 = ssub.s32 512, 512
          %145 = vsyncadd %s139, %s144
          %s146 = smul.addr %s29, 4
          %s147 = sadd.s32 %s30, %s146
          %s148 = smul.addr %s147, 128
          %s149 = scalar_lea.hbm %s1, %s148
          %s150 = sshll.u32 %s142, 4
          %s151 = int_to_ptr.vmem [resolvable:$true] %s150
          %156 = dma.hbm_to_vmem [thread:$0]  %s149, 512, %s151, %s139, 128, 128, 8
        $region20: #{tpu_custom_call.1} parent=15 // pred_fallthru
          _
        // Predicated region
        $region21: #{tpu_custom_call.1} parent=15 // pred_check
          %p157 = pneg %p84
        $region22: #{tpu_custom_call.1} parent=15 // pred_check_branch
          %159 = sbr.rel (%p157) target = $region24
        $region23: #{tpu_custom_call.1} parent=15 // pred_region
          %s160 = sand.u32 %s74, 1
          %s161 = scalar_lea.sflag [#allocation8], %s160
          %s162 = sand.u32 %s74, 1
          %s163 = smul.addr %s162, 8
          %s164 = scalar_lea.vmem [#allocation7], %s163
          %s166 = ssub.s32 128, 128
          %167 = vsyncadd %s161, %s166
          %s168 = sadd.s32 %s30, %s29
          %s169 = smul.addr %s168, 128
          %s170 = scalar_lea.hbm %s2, %s169
          %s172 = sshll.u32 %s164, 4
          %s173 = int_to_ptr.vmem [resolvable:$true] %s172
          %175 = dma.hbm_to_vmem [thread:$0]  %s170, 128, %s173, %s161
        $region24: #{tpu_custom_call.1} parent=15 // pred_fallthru
          _
      $region16: #{tpu_custom_call.1} parent=5 // pred_fallthru
        _
      %p176 = scmp.le.s32.totalorder 1, %s22
      %p177 = scmp.lt.s32.totalorder %s22, 3
      %p178 = pnand %p176, %p177
      %p179 = pneg %p178
      // Predicated region
      $region25: #{tpu_custom_call.1} parent=5 // pred_check
        _
      $region26: #{tpu_custom_call.1} parent=5 // pred_check_branch
        %181 = sbr.rel (%p178) target = $region28
      $region27: #{tpu_custom_call.1} parent=5 // pred_region
        %s182 = ssub.s32 %s22, 1
        %s183 = sand.u32 %s49, 1
        %s184 = scalar_lea.sflag [#allocation5], %s183
        %s185 = sand.u32 %s49, 1
        %s186 = smul.addr %s185, 32
        %s187 = scalar_lea.vmem [#allocation4], %s186
        // Predicated region
        $region29: #{tpu_custom_call.1} parent=27 // pred_check
          %p188 = pneg %p62
        $region30: #{tpu_custom_call.1} parent=27 // pred_check_branch
          %190 = sbr.rel (%p188) target = $region32
        $region31: #{tpu_custom_call.1} parent=27 // pred_region
          %191 = dma.done %s184, 512
        $region32: #{tpu_custom_call.1} parent=27 // pred_fallthru
          _
        %s192 = sand.u32 %s77, 1
        %s193 = scalar_lea.sflag [#allocation8], %s192
        %s194 = sand.u32 %s77, 1
        %s195 = smul.addr %s194, 8
        %s196 = scalar_lea.vmem [#allocation7], %s195
        // Predicated region
        $region33: #{tpu_custom_call.1} parent=27 // pred_check
          %p197 = pneg %p90
        $region34: #{tpu_custom_call.1} parent=27 // pred_check_branch
          %199 = sbr.rel (%p197) target = $region36
        $region35: #{tpu_custom_call.1} parent=27 // pred_region
          %200 = dma.done %s193, 128
        $region36: #{tpu_custom_call.1} parent=27 // pred_fallthru
          _
        %s201 = sand.u32 %s49, 1
        %s202 = scalar_lea.sflag [#allocation5], %s201
        %s203 = sand.u32 %s49, 1
        %s204 = smul.addr %s203, 32
        %s205 = scalar_lea.vmem [#allocation4], %s204
        %p206 = pneg %p62
        %p207 = pneg %p59
        %s208 = sand.u32 %s77, 1
        %s209 = scalar_lea.sflag [#allocation8], %s208
        %s210 = sand.u32 %s77, 1
        %s211 = smul.addr %s210, 8
        %s212 = scalar_lea.vmem [#allocation7], %s211
        %p213 = pneg %p90
        %p214 = pneg %p87
        %p215 = pneg %p116
        %p216 = pneg %p113
        %s217 = sand.u32 %s103, 1
        %s218 = scalar_lea.sflag [#allocation6], %s217
        %s219 = sand.u32 %s103, 1
        %s220 = smul.addr %s219, 8
        %s221 = scalar_lea.vmem [#allocation9], %s220
        %p222 = scmp.eq.s32.totalorder %s32, 0
        // Predicated region
        $region37: #{tpu_custom_call.1} parent=27 // pred_check
          %p223 = pneg %p222
        $region38: #{tpu_custom_call.1} parent=27 // pred_check_branch
          %225 = sbr.rel (%p223) target = $region40
        $region39: #{tpu_custom_call.1} parent=27 // pred_region
          %226 = vst [vmem:[%s221] sm:$0xff] 0.0
        $region40: #{tpu_custom_call.1} parent=27 // pred_fallthru
          _
        %v227 = vld [vmem:[%s187] sm:$0xff]
        %v228 = vld [vmem:[%s187 + $0x8] sm:$0xff]
        %v229 = vld [vmem:[%s187 + $0x10] sm:$0xff]
        %v230 = vld [vmem:[%s187 + $0x18] sm:$0xff]
        %v231 = vld [vmem:[%s196] sm:$0xff]
        %v232 = vmax.f32 %v227, %v228
        %v233 = vmax.f32 %v229, %v230
        %v234 = vmax.f32 %v232, %v233
        %v235 = vsub.f32 %v227, %v234
        %v236 = vsub.f32 %v228, %v234
        %v237 = vsub.f32 %v229, %v234
        %v238 = vsub.f32 %v230, %v234
        %v239 = vmul.f32 %v235, 1.442695
        %v240 = vpow.pop %v239
        %v241 = vmul.f32 %v236, 1.442695
        %v242 = vpow.pop %v241
        %v243 = vmul.f32 %v237, 1.442695
        %v244 = vpow.pop %v243
        %v245 = vmul.f32 %v238, 1.442695
        %v246 = vpow.pop %v245
        %v247 = vadd.f32 %v240, %v242
        %v248 = vadd.f32 %v247, %v244
        %v249 = vadd.f32 %v248, %v246
        %v250 = vlog2.pop %v249
        %v251 = vmul.f32 %v250, 0.6931472
        %vm252 = vcmp.eq.s32.totalorder %v231, 0
        %vm253 = vcmp.eq.s32.totalorder %v231, 1
        %vm254 = vcmp.eq.s32.totalorder %v231, 2
        %vm255 = vcmp.eq.s32.totalorder %v231, 3
        %v256 = vsel %vm252, 1, 0
        %v257 = vsel %vm253, 1, 0
        %v258 = vsel %vm254, 1, 0
        %v259 = vsel %vm255, 1, 0
        %v260 = vcvt.s32.f32 %v256
        %v261 = vcvt.s32.f32 %v257
        %v262 = vcvt.s32.f32 %v258
        %v263 = vcvt.s32.f32 %v259
        %v264 = vmul.f32 %v260, %v235
        %v265 = vmul.f32 %v261, %v236
        %v266 = vmul.f32 %v262, %v237
        %v267 = vmul.f32 %v263, %v238
        %v268 = vadd.f32 %v264, %v265
        %v269 = vadd.f32 %v268, %v266
        %v270 = vadd.f32 %v269, %v267
        %v271 = vsub.f32 %v270, %v251
        %v272 = vmul.f32 %v271, 1.442695
        %v273 = vpow.pop %v272
        %s274 = sld [smem:[#allocation3]]
        %v275 = vstv %s274
        %v276 = vmul.f32 %v260, %v275
        %s277 = sld [smem:[#allocation3 + $0x1]]
        %v278 = vstv %s277
        %v279 = vmul.f32 %v261, %v278
        %v280 = vadd.f32 %v276, %v279
        %s281 = sld [smem:[#allocation3 + $0x2]]
        %v282 = vstv %s281
        %v283 = vmul.f32 %v262, %v282
        %v284 = vadd.f32 %v280, %v283
        %s285 = sld [smem:[#allocation3 + $0x3]]
        %v286 = vstv %s285
        %v287 = vmul.f32 %v263, %v286
        %v288 = vadd.f32 %v284, %v287
        %v289 = vsub.f32 1.0, %v273
        %v290 = vmul.f32 %v289, %v289
        %v291 = vmul.f32 %v288, %v290
        %v292 = vsub.f32 0.0, %v291
        %v293 = vmul.f32 %v292, %v271
        %v294 = vadd.f32 %v293, 0.0
        %v295 = vld [vmem:[%s221] sm:$0xff]
        %v296 = vadd.f32 %v295, %v294
        %297 = vst [vmem:[%s221] sm:$0xff] %v296
        %s298 = sand.u32 %s103, 1
        %s299 = scalar_lea.sflag [#allocation6], %s298
        %s300 = sand.u32 %s103, 1
        %s301 = smul.addr %s300, 8
        %s302 = scalar_lea.vmem [#allocation9], %s301
        // Predicated region
        $region41: #{tpu_custom_call.1} parent=27 // pred_check
          %p303 = pneg %p113
        $region42: #{tpu_custom_call.1} parent=27 // pred_check_branch
          %305 = sbr.rel (%p303) target = $region44
        $region43: #{tpu_custom_call.1} parent=27 // pred_region
          %s307 = ssub.s32 128, 128
          %308 = vsyncadd %s299, %s307
          %s309 = smul.addr %s31, 128
          %s310 = scalar_lea.hbm %s3, %s309
          %s312 = sshll.u32 %s302, 4
          %s313 = int_to_ptr.vmem [resolvable:$true] %s312
          %315 = dma.vmem_to_hbm [thread:$0]  %s313, 128, %s310, %s299
        $region44: #{tpu_custom_call.1} parent=27 // pred_fallthru
          _
      $region28: #{tpu_custom_call.1} parent=5 // pred_fallthru
        _
      %p316 = scmp.le.s32.totalorder 2, %s22
      // Predicated region
      $region45: #{tpu_custom_call.1} parent=5 // pred_check
        %p317 = pneg %p316
      $region46: #{tpu_custom_call.1} parent=5 // pred_check_branch
        %319 = sbr.rel (%p317) target = $region48
      $region47: #{tpu_custom_call.1} parent=5 // pred_region
        %s320 = ssub.s32 %s22, 2
        // Predicated region
        $region49: #{tpu_custom_call.1} parent=47 // pred_check
          %p321 = pneg %p119
        $region50: #{tpu_custom_call.1} parent=47 // pred_check_branch
          %323 = sbr.rel (%p321) target = $region52
        $region51: #{tpu_custom_call.1} parent=47 // pred_region
          %s324 = sand.u32 %s104, 1
          %s325 = scalar_lea.sflag [#allocation6], %s324
          %s326 = sand.u32 %s104, 1
          %s327 = smul.addr %s326, 8
          %s328 = scalar_lea.vmem [#allocation9], %s327
          %329 = dma.done %s325, 128
        $region52: #{tpu_custom_call.1} parent=47 // pred_fallthru
          _
      $region48: #{tpu_custom_call.1} parent=5 // pred_fallthru
        _
    $region6: #{tpu_custom_call.1} parent=1 // loop_footer
      %s26 = sadd.s32 1, %s22
    $region7: #{tpu_custom_call.1} parent=1 // loop_footer_branch
      %21 = sbr.rel target = $region3
    $region8: #{tpu_custom_call.1} parent=1 // loop_exit
      _
    %330 = vsyncpa [#allocation5], 1
    %s331 = scalar_lea.sflag [#allocation5], 1
    %332 = vsyncpa %s331, 1
    %333 = vsyncpa [#allocation8], 1
    %s334 = scalar_lea.sflag [#allocation8], 1
    %335 = vsyncpa %s334, 1
    %336 = vsyncpa [#allocation6], 1
    %s337 = scalar_lea.sflag [#allocation6], 1
    %338 = vsyncpa %s337, 1

</llo_original>
